<compile_context>
chip_gen: v7x
topology: tpu7x:2x2x1
jax: 0.10.0
libtpu: 0.0.40
codegen_flags: <defaults>
</compile_context>

<pallas_src>
import jax
import jax.numpy as jnp
from jax import lax
from jax.experimental import pallas as pl
from jax.experimental.pallas import tpu as pltpu

_EPS = 1e-12  # F.normalize default eps


def _round_up(a, b):
    return ((a + b - 1) // b) * b


def _cdiv(a, b):
    return (a + b - 1) // b


# ---------------------------------------------------------------------------
# Kernel bodies (one compute routine, two block layouts).
# ---------------------------------------------------------------------------
def _router_tile(x, wn, out_dtype):
    """One (slots, TN) logits tile from a (TN, D) token tile.

    x  : (TN, D) token tile, native dtype (bf16 stays bf16 into the MXU)
    wn : (slots, D) pre-normalized, pre-scaled weights
    """
    # Raw logits on the MXU, contracting the last dim of both operands
    # (flash-attention style q @ k^T form; no materialized transpose of the
    # big x tile).
    logits = lax.dot_general(
        wn, x,
        dimension_numbers=(((1,), (1,)), ((), ())),
        preferred_element_type=jnp.float32,
    )  # (slots, TN) f32

    # Per-token L2 normalization folded into the epilogue. The sum of squares
    # is a second MXU contraction against a ones row so the (1, TN) result is
    # already laid out along lanes to scale `logits` (no XLU cross-lane
    # reduce, no sublane->lane relayout, no full-tile f32 upcast of x).
    xsq = x * x                                           # native-dtype square
    ones_row = jnp.ones((1, x.shape[-1]), dtype=x.dtype)
    sumsq = lax.dot_general(
        ones_row, xsq,
        dimension_numbers=(((1,), (1,)), ((), ())),
        preferred_element_type=jnp.float32,
    )  # (1, TN) f32
    # 1 / max(||x||, eps) == rsqrt(max(sum(x^2), eps^2))   (rsqrt -> EUP)
    inv = lax.rsqrt(jnp.maximum(sumsq, _EPS * _EPS))
    return (logits * inv).astype(out_dtype)


def _kernel_flat(x_ref, wn_ref, o_ref):
    # x_ref: (TN, D), wn_ref: (slots, D), o_ref: (slots, TN)
    o_ref[...] = _router_tile(x_ref[...], wn_ref[...], o_ref.dtype)


def _kernel_batched(x_ref, wn_ref, o_ref):
    # x_ref: (1, TN, D), wn_ref: (slots, D), o_ref: (1, slots, TN)
    o_ref[0] = _router_tile(x_ref[0], wn_ref[...], o_ref.dtype)


# ---------------------------------------------------------------------------
# Tile sizing.
# ---------------------------------------------------------------------------
def _vmem_capacity_bytes():
    try:
        cap = getattr(pltpu.get_tpu_info(), "vmem_capacity_bytes", None)
        if cap:
            return int(cap)
    except Exception:
        pass
    return 64 << 20  # v7x per-TC VMEM: the smallest across v5e/v6e/v7x


def _pick_token_tile(L, D, slots, itemsize, single_grid_axis):
    """Token-tile length TN along a streamed token axis of length L."""
    vmem = _vmem_capacity_bytes()
    # Per-token working-set bytes, VMEM-layout aware (last dim pads to 128
    # lanes): double-buffered x tile + in-kernel squares temp (3x D), f32
    # logits temp + double-buffered f32 output tile (3x slots), slack.
    d_pad = _round_up(D, 128)
    s_pad = _round_up(slots, 8)
    per_token = 3 * d_pad * itemsize + 3 * s_pad * 4 + 16
    budget = min(vmem // 2, 48 << 20)   # leave >= half of VMEM for the compiler
    tn = max(128, (budget // per_token) // 128 * 128)    # lane-dense out tiles
    if single_grid_axis:
        # Keep >= 2 grid steps when there is enough work so v7x can shard the
        # token axis across both TensorCores (harmless on 1-TC chips).
        tn = min(tn, max(128, _round_up(_cdiv(L, 2), 128)))
    if tn >= L:
        tn = L                           # single full-extent block
    vmem_limit = int(max(vmem - (16 << 20), budget + (16 << 20)))
    return tn, vmem_limit


# ---------------------------------------------------------------------------
# Wrapper.
# ---------------------------------------------------------------------------
def soft_router(x, weight, scale):
    """x: (B, N, D), weight: (slots, D), scale: () -> f32 logits (B, slots, N)."""
    B, N, D = x.shape
    slots, Dw = weight.shape
    assert D == Dw
    itemsize = jnp.dtype(x.dtype).itemsize

    # Normalize + scale the weight once in the wrapper (only slots x D work).
    w32 = weight.astype(jnp.float32)
    w_norm = jnp.sqrt(jnp.sum(w32 * w32, axis=-1, keepdims=True))
    scale32 = jnp.asarray(scale, dtype=jnp.float32)
    wn = (scale32 * w32 / jnp.maximum(w_norm, _EPS)).astype(x.dtype)

    cost = pl.CostEstimate(
        flops=2 * B * N * slots * D + 3 * B * N * D,
        transcendentals=B * N,
        bytes_accessed=B * N * D * itemsize + slots * D * itemsize
        + B * slots * N * 4,
    )

    # "batched" path: 2-D grid (B, N-tiles) writes (B, slots, N) directly ->
    # no trailing XLA transpose.  Taken when one per-batch tile carries enough
    # bytes to amortize the per-grid-step pipeline cost (or trivially B == 1).
    use_batched = (B == 1) or (N * D * itemsize >= (2 << 20))

    if use_batched:
        tn, vmem_limit = _pick_token_tile(N, D, slots, itemsize,
                                          single_grid_axis=(B == 1))
        return pl.pallas_call(
            _kernel_batched,
            out_shape=jax.ShapeDtypeStruct((B, slots, N), jnp.float32),
            grid_spec=pltpu.PrefetchScalarGridSpec(
                num_scalar_prefetch=0,
                grid=(B, _cdiv(N, tn)),              # ragged tail masked by Pallas
                in_specs=[
                    pl.BlockSpec((1, tn, D), lambda b, t: (b, t, 0)),
                    pl.BlockSpec((slots, D), lambda b, t: (0, 0)),  # resident
                ],
                out_specs=pl.BlockSpec((1, slots, tn), lambda b, t: (b, 0, t)),
            ),
            compiler_params=pltpu.CompilerParams(
                dimension_semantics=("parallel", "parallel"),
                vmem_limit_bytes=vmem_limit,
            ),
            cost_estimate=cost,
        )(x, wn)

    # "flat" path: flatten batch into one token axis so tiles span batch
    # boundaries (one lane-dense matmul stream even for many short sequences).
    M = B * N
    x_flat = x.reshape(M, D)                             # contiguous, no copy
    tn, vmem_limit = _pick_token_tile(M, D, slots, itemsize,
                                      single_grid_axis=True)
    out = pl.pallas_call(
        _kernel_flat,
        out_shape=jax.ShapeDtypeStruct((slots, M), jnp.float32),
        grid_spec=pltpu.PrefetchScalarGridSpec(
            num_scalar_prefetch=0,
            grid=(_cdiv(M, tn),),                        # no jnp.pad copy of x
            in_specs=[
                pl.BlockSpec((tn, D), lambda i: (i, 0)),     # streamed tokens
                pl.BlockSpec((slots, D), lambda i: (0, 0)),  # resident weights
            ],
            out_specs=pl.BlockSpec((slots, tn), lambda i: (0, i)),
        ),
        compiler_params=pltpu.CompilerParams(
            dimension_semantics=("parallel",),
            vmem_limit_bytes=vmem_limit,
        ),
        cost_estimate=cost,
    )(x_flat, wn)
    # Small f32 (slots, B, N) -> (B, slots, N) relayout; only taken when N is
    # too short for per-batch tiles to amortize the per-step pipeline cost.
    return jnp.transpose(out.reshape(slots, B, N), (1, 0, 2))


def soft_router_ref(x, weight, scale):
    """Pure-JAX reference for correctness checking."""
    xn = x / jnp.maximum(jnp.linalg.norm(x, axis=-1, keepdims=True), _EPS)
    wn = scale * weight / jnp.maximum(
        jnp.linalg.norm(weight, axis=-1, keepdims=True), _EPS
    )
    return jnp.einsum("sd,bnd->bsn", wn, xn)


if __name__ == "__main__":
    # Module config (synthetic, deterministic init; no checkpoint load).
    B, N, D = 2, 16, 32     # batch, tokens, dim
    SLOTS = 8               # experts * slots_per_expert

    key = jax.random.PRNGKey(0)
    kx, kw = jax.random.split(key)

    x = jax.random.normal(kx, (B, N, D), dtype=jnp.float32)
    # trunc_normal_(weight, std=0.02)
    weight = 0.02 * jax.random.truncated_normal(
        kw, -2.0, 2.0, (SLOTS, D), dtype=jnp.float32
    )
    # nn.init.ones_(scale)
    scale = jnp.ones((), dtype=jnp.float32)

    logits = soft_router(x, weight, scale)
    jax.block_until_ready(logits)
    ref = soft_router_ref(x, weight, scale)
    assert logits.shape == (B, SLOTS, N)
    assert jnp.allclose(logits, ref, atol=1e-5, rtol=1e-5)

    # Exercise the direct-layout (no-transpose) batched path (B == 1) ...
    l1 = soft_router(x[:1], weight, scale)
    jax.block_until_ready(l1)
    assert jnp.allclose(l1, soft_router_ref(x[:1], weight, scale),
                        atol=1e-5, rtol=1e-5)

    # ... and the un-padded ragged-tail path (token count % tile != 0).
    x2 = jax.random.normal(jax.random.PRNGKey(1), (2, 200, D), dtype=jnp.float32)
    l2 = soft_router(x2, weight, scale)
    jax.block_until_ready(l2)
    assert jnp.allclose(l2, soft_router_ref(x2, weight, scale),
                        atol=1e-5, rtol=1e-5)

    # TODO(synk): training-time noise (noise_std > 0) adds randn to x *after*
    # the logits are computed in the PyTorch module, so it never affects the
    # returned logits and is intentionally not implemented.

    print("KERNEL_OK")
</pallas_src>

<mosaic_0001>
module attributes {stable_mosaic.version = 11 : i64} {
  func.func @_kernel_flat(%arg0: i32, %arg1: memref<32x32xf32, #tpu.memory_space<vmem>>, %arg2: memref<8x32xf32, #tpu.memory_space<vmem>>, %arg3: memref<8x32xf32, #tpu.memory_space<vmem>>) attributes {dimension_semantics = [#tpu.dimension_semantics<parallel>], iteration_bounds = array<i64: 1>, scalar_prefetch = 0 : i64, scratch_operands = 0 : i64, tpu.core_type = #tpu.core_type<tc>, window_params = [{transform_indices = @transform_0, window_bounds = array<i64: 32, 32>}, {pipeline_mode = #tpu.pipeline_mode<synchronous>, transform_indices = @transform_1, window_bounds = array<i64: 8, 32>}, {transform_indices = @transform_2, window_bounds = array<i64: 8, 32>}]} {
    %c0 = arith.constant 0 : index
    %c0_0 = arith.constant 0 : index
    %0 = vector.load %arg1[%c0, %c0_0] : memref<32x32xf32, #tpu.memory_space<vmem>>, vector<32x32xf32>
    %c0_1 = arith.constant 0 : index
    %c0_2 = arith.constant 0 : index
    %1 = vector.load %arg2[%c0_1, %c0_2] : memref<8x32xf32, #tpu.memory_space<vmem>>, vector<8x32xf32>
    %cst = arith.constant dense<0.000000e+00> : vector<8x32xf32>
    %2 = tpu.matmul %1, %0, %cst {dimension_numbers = #tpu.dot_dimension_numbers<[1], [1], [0], [0], [0, 0, 1, 0], [], []>} : vector<8x32xf32>, vector<32x32xf32>, vector<8x32xf32> -> vector<8x32xf32>
    %3 = arith.mulf %0, %0 : vector<32x32xf32>
    %cst_3 = arith.constant 1.000000e+00 : f32
    %4 = vector.broadcast %cst_3 : f32 to vector<1x32xf32>
    %cst_4 = arith.constant dense<0.000000e+00> : vector<1x32xf32>
    %5 = tpu.matmul %4, %3, %cst_4 {dimension_numbers = #tpu.dot_dimension_numbers<[1], [1], [0], [0], [0, 0, 1, 0], [], []>} : vector<1x32xf32>, vector<32x32xf32>, vector<1x32xf32> -> vector<1x32xf32>
    %cst_5 = arith.constant 1.000000e-24 : f32
    %6 = vector.broadcast %cst_5 : f32 to vector<1x32xf32>
    %7 = arith.maximumf %5, %6 : vector<1x32xf32>
    %8 = math.rsqrt %7 : vector<1x32xf32>
    %9 = vector.broadcast %8 : vector<1x32xf32> to vector<8x32xf32>
    %10 = arith.mulf %2, %9 : vector<8x32xf32>
    %c0_6 = arith.constant 0 : index
    %c0_7 = arith.constant 0 : index
    %11 = vector.load %arg3[%c0_6, %c0_7] : memref<8x32xf32, #tpu.memory_space<vmem>>, vector<8x32xf32>
    tpu.vector_store %arg3[%c0_6, %c0_7], %10 {strides = array<i32>} : memref<8x32xf32, #tpu.memory_space<vmem>>, vector<8x32xf32>,
    return
  }
  func.func @transform_0(%arg0: i32) -> (i32, i32) {
    %c0_i32 = arith.constant 0 : i32
    %c0_i32_0 = arith.constant 0 : i32
    return %arg0, %c0_i32 : i32, i32
  }
  func.func @transform_1(%arg0: i32) -> (i32, i32) {
    %c0_i32 = arith.constant 0 : i32
    %c0_i32_0 = arith.constant 0 : i32
    %c0_i32_1 = arith.constant 0 : i32
    return %c0_i32, %c0_i32_0 : i32, i32
  }
  func.func @transform_2(%arg0: i32) -> (i32, i32) {
    %c0_i32 = arith.constant 0 : i32
    %c0_i32_0 = arith.constant 0 : i32
    return %c0_i32, %arg0 : i32, i32
  }
}

</mosaic_0001>

<llo_original>
// kernel: tpu_custom_call.1
$region0: #{tpu_custom_call.1}
  #allocation0 [shape = 'u32[]', space=smem, size = 0x4, offset = 0x4, fixed_abs, tag = 'smem constant byte address 0x4 - core index']
  #allocation1 [shape = 'u32[144,128]{1,0:T(1,128)}', space=vmem, size = 0x12000, scoped, tag = 'internal scratch']
  %s0 = inlined_call_operand.hbm [shape: f32[32,32], index: 0, kind: input, shape index: {}]
  %s1 = inlined_call_operand.hbm [shape: f32[8,32], index: 1, kind: input, shape index: {}]
  %s2 = inlined_call_operand.hbm [shape: f32[8,32], index: 2, kind: output, shape index: {}]
  %s3 = sld [smem:[#allocation0]]
  $region26: #{tpu_custom_call.1} parent=0
    _
  %s5 = ssub.s32 1, %s3
  %s6 = scalar_select 0, %s5, %s3
  $region1: #{tpu_custom_call.1} parent=0
    #allocation2 [shape = 'u8[16384]{0}', space=vmem, size = 0x4000, scoped, tag = 'input window, operand 0, single buffered']
    #allocation3 [shape = 's32[1]{0}', space=sflag, size = 0x4, scoped, tag = 'scoped memory for tpu_custom_call.1']
    #allocation4 [shape = 's32[1]{0}', space=sflag, size = 0x4, scoped, tag = 'scoped memory for tpu_custom_call.1']
    #allocation5 [shape = 'u8[4096]{0}', space=vmem, size = 0x1000, scoped, tag = 'input window, operand 1, single buffered']
    #allocation6 [shape = 's32[1]{0}', space=sflag, size = 0x4, scoped, tag = 'scoped memory for tpu_custom_call.1']
    #allocation7 [shape = 'u8[4096]{0}', space=vmem, size = 0x1000, scoped, tag = 'output window, operand 0, single buffered']
    %7 = vsyncpa [#allocation3], 0
    %8 = vsyncpa [#allocation6], 0
    %9 = vsyncpa [#allocation4], 0
    // Predicated region
    $region2: #{tpu_custom_call.1} parent=1 // pred_check
      _
    $region3: #{tpu_custom_call.1} parent=1 // pred_check_branch
      %11 = sbr.rel (0) target = $region5
    $region4: #{tpu_custom_call.1} parent=1 // pred_region
      %s13 = ssub.s32 512, 512
      %14 = vsyncadd [#allocation3], %s13
      %s15 = sshll.u32 [#allocation2], 4
      %s16 = int_to_ptr.vmem [resolvable:$true] %s15
      %21 = dma.hbm_to_vmem [thread:$0]  %s0, 512, %s16, [#allocation3], 128, 128, 8
    $region5: #{tpu_custom_call.1} parent=1 // pred_fallthru
      _
    // Predicated region
    $region6: #{tpu_custom_call.1} parent=1 // pred_check
      _
    $region7: #{tpu_custom_call.1} parent=1 // pred_check_branch
      %23 = sbr.rel (0) target = $region9
    $region8: #{tpu_custom_call.1} parent=1 // pred_region
      %s25 = ssub.s32 128, 128
      %26 = vsyncadd [#allocation6], %s25
      %s28 = sshll.u32 [#allocation5], 4
      %s29 = int_to_ptr.vmem [resolvable:$true] %s28
      %31 = dma.hbm_to_vmem [thread:$0]  %s1, 128, %s29, [#allocation6]
    $region9: #{tpu_custom_call.1} parent=1 // pred_fallthru
      _
    // Predicated region
    $region10: #{tpu_custom_call.1} parent=1 // pred_check
      _
    $region11: #{tpu_custom_call.1} parent=1 // pred_check_branch
      %33 = sbr.rel (0) target = $region13
    $region12: #{tpu_custom_call.1} parent=1 // pred_region
      %34 = dma.done [#allocation3], 512
    $region13: #{tpu_custom_call.1} parent=1 // pred_fallthru
      _
    // Predicated region
    $region14: #{tpu_custom_call.1} parent=1 // pred_check
      _
    $region15: #{tpu_custom_call.1} parent=1 // pred_check_branch
      %36 = sbr.rel (0) target = $region17
    $region16: #{tpu_custom_call.1} parent=1 // pred_region
      %37 = dma.done [#allocation6], 128
    $region17: #{tpu_custom_call.1} parent=1 // pred_fallthru
      _
    %v38 = vld [vmem:[#allocation2] sm:$0xff]
    %v39 = vld [vmem:[#allocation2 + $0x8] sm:$0xff]
    %v40 = vld [vmem:[#allocation2 + $0x10] sm:$0xff]
    %v41 = vld [vmem:[#allocation2 + $0x18] sm:$0xff]
    %v42 = vld [vmem:[#allocation5] sm:$0xff]
    %vm43 = vcmask 261120
    %v45 = vsel %vm43, %v42, 0
    %v48 = vsel %vm43, %v38, 0
    %v51 = vsel %vm43, %v39, 0
    %v54 = vsel %vm43, %v40, 0
    %v57 = vsel %vm43, %v41, 0
    %59 = vmatprep.subr.mxu0 0.0
    %60 = vmatpush1.xpose.msra.mxu0 %v48
    %61 = vmatprep.subr.mxu0 0.0
    %62 = vmatpush1.xpose.msra.mxu0 %v51
    %63 = vmatprep.subr.mxu0 0.0
    %64 = vmatpush1.xpose.msra.mxu0 %v54
    %65 = vmatprep.subr.mxu0 0.0
    %66 = vmatpush1.xpose.msra.mxu0 %v57
    %67 = vmatprep.subr.mxu0 0.0
    %68 = vmatpush1.xpose.msra.mxu0 0.0
    %69 = vmatprep.subr.mxu0 0.0
    %70 = vmatpush1.xpose.msra.mxu0 0.0
    %71 = vmatprep.subr.mxu0 0.0
    %72 = vmatpush1.xpose.msra.mxu0 0.0
    %73 = vmatprep.subr.mxu0 0.0
    %74 = vmatpush1.xpose.msra.mxu0 0.0
    %75 = vmatprep.subr.mxu0 0.0
    %76 = vmatpush1.xpose.msra.mxu0 0.0
    %77 = vmatprep.subr.mxu0 0.0
    %78 = vmatpush1.xpose.msra.mxu0 0.0
    %79 = vmatprep.subr.mxu0 0.0
    %80 = vmatpush1.xpose.msra.mxu0 0.0
    %81 = vmatprep.subr.mxu0 0.0
    %82 = vmatpush1.xpose.msra.mxu0 0.0
    %83 = vmatprep.subr.mxu0 0.0
    %84 = vmatpush1.xpose.msra.mxu0 0.0
    %85 = vmatprep.subr.mxu0 0.0
    %86 = vmatpush1.xpose.msra.mxu0 0.0
    %87 = vmatprep.subr.mxu0 0.0
    %88 = vmatpush1.xpose.msra.mxu0 0.0
    %89 = vmatprep.subr.mxu0 0.0
    %90 = vmatpush1.xpose.msra.mxu0 0.0
    %91 = vmatprep.subr.mxu0 0.0
    %92 = vmatpush1.xpose.msra.mxu0 0.0
    %93 = vmatprep.subr.mxu0 0.0
    %94 = vmatpush1.xpose.msra.mxu0 0.0
    %95 = vmatprep.subr.mxu0 0.0
    %96 = vmatpush1.xpose.msra.mxu0 0.0
    %97 = vmatprep.subr.mxu0 0.0
    %98 = vmatpush1.xpose.msra.mxu0 0.0
    %99 = vmatprep.subr.mxu0 0.0
    %100 = vmatpush1.xpose.msra.mxu0 0.0
    %101 = vmatprep.subr.mxu0 0.0
    %102 = vmatpush1.xpose.msra.mxu0 0.0
    %103 = vmatprep.subr.mxu0 0.0
    %104 = vmatpush1.xpose.msra.mxu0 0.0
    %105 = vmatprep.subr.mxu0 0.0
    %106 = vmatpush1.xpose.msra.mxu0 0.0
    %107 = vmatprep.subr.mxu0 0.0
    %108 = vmatpush1.xpose.msra.mxu0 0.0
    %109 = vmatprep.subr.mxu0 0.0
    %110 = vmatpush1.xpose.msra.mxu0 0.0
    %111 = vmatprep.subr.mxu0 0.0
    %112 = vmatpush1.xpose.msra.mxu0 0.0
    %113 = vmatprep.subr.mxu0 0.0
    %114 = vmatpush1.xpose.msra.mxu0 0.0
    %115 = vmatprep.subr.mxu0 0.0
    %116 = vmatpush1.xpose.msra.mxu0 0.0
    %117 = vmatprep.subr.mxu0 0.0
    %118 = vmatpush1.xpose.msra.mxu0 0.0
    %119 = vmatprep.subr.mxu0 0.0
    %120 = vmatpush1.xpose.msra.mxu0 0.0
    %121 = vmatprep.subr.mxu0 0.0
    %122 = vmatpush1.xpose.msra.mxu0 0.0
    %123 = vmatprep.mubr.f32.mxu0 0.0
    %124 = vmatmul.mubr.f32.gmra.mrb[0].mxu0 %v45
    %v125 = vpop.f32.mrb[0].mxu0
    %v126 = vadd.f32 0.0, %v125
    %v127 = vpop.f32.mrb[0].mxu0
    %128 = vdwg.mxu0
    %v129 = vmul.f32 %v38, %v38
    %v130 = vmul.f32 %v39, %v39
    %v131 = vmul.f32 %v40, %v40
    %v132 = vmul.f32 %v41, %v41
    %v134 = vsel %vm43, 1.0, 0
    %v137 = vsel %vm43, %v129, 0
    %v140 = vsel %vm43, %v130, 0
    %v143 = vsel %vm43, %v131, 0
    %v146 = vsel %vm43, %v132, 0
    %148 = vmatprep.subr.mxu0 0.0
    %149 = vmatpush1.xpose.msra.mxu0 %v137
    %150 = vmatprep.subr.mxu0 0.0
    %151 = vmatpush1.xpose.msra.mxu0 %v140
    %152 = vmatprep.subr.mxu0 0.0
    %153 = vmatpush1.xpose.msra.mxu0 %v143
    %154 = vmatprep.subr.mxu0 0.0
    %155 = vmatpush1.xpose.msra.mxu0 %v146
    %156 = vmatprep.subr.mxu0 0.0
    %157 = vmatpush1.xpose.msra.mxu0 0.0
    %158 = vmatprep.subr.mxu0 0.0
    %159 = vmatpush1.xpose.msra.mxu0 0.0
    %160 = vmatprep.subr.mxu0 0.0
    %161 = vmatpush1.xpose.msra.mxu0 0.0
    %162 = vmatprep.subr.mxu0 0.0
    %163 = vmatpush1.xpose.msra.mxu0 0.0
    %164 = vmatprep.subr.mxu0 0.0
    %165 = vmatpush1.xpose.msra.mxu0 0.0
    %166 = vmatprep.subr.mxu0 0.0
    %167 = vmatpush1.xpose.msra.mxu0 0.0
    %168 = vmatprep.subr.mxu0 0.0
    %169 = vmatpush1.xpose.msra.mxu0 0.0
    %170 = vmatprep.subr.mxu0 0.0
    %171 = vmatpush1.xpose.msra.mxu0 0.0
    %172 = vmatprep.subr.mxu0 0.0
    %173 = vmatpush1.xpose.msra.mxu0 0.0
    %174 = vmatprep.subr.mxu0 0.0
    %175 = vmatpush1.xpose.msra.mxu0 0.0
    %176 = vmatprep.subr.mxu0 0.0
    %177 = vmatpush1.xpose.msra.mxu0 0.0
    %178 = vmatprep.subr.mxu0 0.0
    %179 = vmatpush1.xpose.msra.mxu0 0.0
    %180 = vmatprep.subr.mxu0 0.0
    %181 = vmatpush1.xpose.msra.mxu0 0.0
    %182 = vmatprep.subr.mxu0 0.0
    %183 = vmatpush1.xpose.msra.mxu0 0.0
    %184 = vmatprep.subr.mxu0 0.0
    %185 = vmatpush1.xpose.msra.mxu0 0.0
    %186 = vmatprep.subr.mxu0 0.0
    %187 = vmatpush1.xpose.msra.mxu0 0.0
    %188 = vmatprep.subr.mxu0 0.0
    %189 = vmatpush1.xpose.msra.mxu0 0.0
    %190 = vmatprep.subr.mxu0 0.0
    %191 = vmatpush1.xpose.msra.mxu0 0.0
    %192 = vmatprep.subr.mxu0 0.0
    %193 = vmatpush1.xpose.msra.mxu0 0.0
    %194 = vmatprep.subr.mxu0 0.0
    %195 = vmatpush1.xpose.msra.mxu0 0.0
    %196 = vmatprep.subr.mxu0 0.0
    %197 = vmatpush1.xpose.msra.mxu0 0.0
    %198 = vmatprep.subr.mxu0 0.0
    %199 = vmatpush1.xpose.msra.mxu0 0.0
    %200 = vmatprep.subr.mxu0 0.0
    %201 = vmatpush1.xpose.msra.mxu0 0.0
    %202 = vmatprep.subr.mxu0 0.0
    %203 = vmatpush1.xpose.msra.mxu0 0.0
    %204 = vmatprep.subr.mxu0 0.0
    %205 = vmatpush1.xpose.msra.mxu0 0.0
    %206 = vmatprep.subr.mxu0 0.0
    %207 = vmatpush1.xpose.msra.mxu0 0.0
    %208 = vmatprep.subr.mxu0 0.0
    %209 = vmatpush1.xpose.msra.mxu0 0.0
    %210 = vmatprep.subr.mxu0 0.0
    %211 = vmatpush1.xpose.msra.mxu0 0.0
    %212 = vmatprep.mubr.f32.mxu0 0.0
    %213 = vmatmul.mubr.f32.gmra.mrb[0].mxu0 %v134
    %v214 = vpop.f32.mrb[0].mxu0
    %v215 = vadd.f32 0.0, %v214
    %v216 = vpop.f32.mrb[0].mxu0
    %217 = vdwg.mxu0
    %v218 = vmax.f32 %v215, 1e-24
    %v219 = vrsqrt.pop %v218
    %v220 = vlaneseq
    %v221 = vshrl.u32 %v220, 7
    %v222 = vsub.s32 0, %v221
    %v223 = vrot.slane %v219, %v222
    %v224 = vmul.f32 %v126, %v223
    %225 = vst.msk [vmem:[#allocation7] sm:$0xff] %vm43, %v224
    // Predicated region
    $region18: #{tpu_custom_call.1} parent=1 // pred_check
      _
    $region19: #{tpu_custom_call.1} parent=1 // pred_check_branch
      %227 = sbr.rel (0) target = $region21
    $region20: #{tpu_custom_call.1} parent=1 // pred_region
      %s229 = ssub.s32 128, 128
      %230 = vsyncadd [#allocation4], %s229
      %s232 = sshll.u32 [#allocation7], 4
      %s233 = int_to_ptr.vmem [resolvable:$true] %s232
      %235 = dma.vmem_to_hbm [thread:$0]  %s233, 128, %s2, [#allocation4]
    $region21: #{tpu_custom_call.1} parent=1 // pred_fallthru
      _
    // Predicated region
    $region22: #{tpu_custom_call.1} parent=1 // pred_check
      _
    $region23: #{tpu_custom_call.1} parent=1 // pred_check_branch
      %237 = sbr.rel (0) target = $region25
    $region24: #{tpu_custom_call.1} parent=1 // pred_region
      %238 = dma.done [#allocation4], 128
    $region25: #{tpu_custom_call.1} parent=1 // pred_fallthru
      _
    %239 = vsyncpa [#allocation3], 1
    %240 = vsyncpa [#allocation6], 1
    %241 = vsyncpa [#allocation4], 1

</llo_original>
